<compile_context>
chip_gen: v7x
topology: tpu7x:2x2x1
jax: 0.10.0
libtpu: 0.0.40
codegen_flags: <defaults>
</compile_context>

<pallas_src>
import functools

import jax
import jax.numpy as jnp
from jax.experimental import pallas as pl
from jax.experimental.pallas import tpu as pltpu

EPS = 1e-5  # nn.InstanceNorm2d default eps
HIGHEST = jax.lax.Precision.HIGHEST  # used only by the pure-JAX reference


def _ceil_to(x, m):
    return ((x + m - 1) // m) * m


# ----------------------------- Pallas kernels ------------------------------

def _conv_relu_kernel(p_ref, w_ref, b_ref, o_ref):
    # mlp_shared: Conv2d(label_nc -> nhidden, 3x3, pad 1) + ReLU, as im2col matmul.
    # bf16 operands on the MXU, f32 accumulate, bf16 activation output.
    acc = jnp.dot(p_ref[...], w_ref[...], preferred_element_type=jnp.float32)
    acc = acc + b_ref[...]
    o_ref[...] = jnp.maximum(acc, 0.0).astype(o_ref.dtype)


def _spade_kernel(a_ref, w_ref, b_ref, x_ref, o_ref, *, wp, co, lvp, hw):
    # Per batch element (one grid step):
    #  a_ref: (Lp, C)    bf16 - zero-padded ReLU activation, spatial flattened (H+2)*(W+2) row-major
    #  w_ref: (9, C, NP) bf16 - per-tap fused [gamma | beta] conv weights, lanes padded to NP
    #  b_ref: (1, NP)    f32  - fused bias
    #  x_ref: (co, lvp)  f32  - raw x, NCHW-flat with W zero-padded to W+2 and lanes to lvp
    #  o_ref: (co, lvp)  f32  - SPADE output, same lane-dense layout
    inv_hw = 1.0 / hw

    # Fused param-free InstanceNorm2d: padded lanes are zero, so plain lane sums / (H*W) are exact.
    x = x_ref[...]
    mean = jnp.sum(x, axis=-1, keepdims=True) * inv_hw
    ex2 = jnp.sum(x * x, axis=-1, keepdims=True) * inv_hw
    var = ex2 - mean * mean                                        # biased variance (ddof=0)
    nrm = (x - mean) * jax.lax.rsqrt(var + EPS)                    # junk lanes -> junk, dropped later

    # 3x3 conv as 9 shifted sub-matmuls over the flattened padded slab (no im2col of activations).
    acc = None
    for dy in range(3):
        for dx in range(3):
            t = dy * 3 + dx
            s = dy * wp + dx
            a_tap = a_ref[s:s + lvp, :]                            # shifted slab = 3x3 tap
            d = jnp.dot(a_tap, w_ref[t], preferred_element_type=jnp.float32)
            acc = d if acc is None else acc + d                    # (lvp, NP) f32
    acc = acc + b_ref[...]

    gb = acc.T                                                     # (NP, lvp): lane-dense, 128-aligned
    gamma = gb[:co, :]
    beta = gb[co:2 * co, :]
    o_ref[...] = nrm * (1.0 + gamma) + beta


# ------------------------------ JAX glue ------------------------------------

def nearest_resize_nchw(seg, H, W):
    # PyTorch F.interpolate(mode='nearest'): src = floor(dst * in / out)
    N, C, Hi, Wi = seg.shape
    ry = (jnp.arange(H) * Hi) // H
    rx = (jnp.arange(W) * Wi) // W
    return seg[:, :, ry[:, None], rx[None, :]]


def im2col_3x3(x_nhwc):
    # (N, H, W, C) -> (N*H*W, 9*C), tap-major (dy, dx) outer, channel inner.
    # Only used for the tiny segmap (9*label_nc columns), not the nhidden activation.
    N, H, W, C = x_nhwc.shape
    xp = jnp.pad(x_nhwc, ((0, 0), (1, 1), (1, 1), (0, 0)))
    cols = []
    for dy in range(3):
        for dx in range(3):
            cols.append(xp[:, dy:dy + H, dx:dx + W, :])
    return jnp.concatenate(cols, axis=-1).reshape(N * H * W, 9 * C)


# --------------------------- pallas_call wrappers ----------------------------

def conv3x3_relu(x_nhwc, w_mat, b, *, tile_rows=256):
    # NOTE: K = 9*label_nc is tiny (lanes under-utilized); kept in Pallas for completeness.
    N, H, W, Cin = x_nhwc.shape
    P = im2col_3x3(x_nhwc.astype(jnp.bfloat16))              # (R, 9*Cin) bf16
    R, K = P.shape
    Cout = w_mat.shape[1]
    T = min(tile_rows, _ceil_to(R, 8))
    Rp = _ceil_to(R, T)
    if Rp != R:
        P = jnp.pad(P, ((0, Rp - R), (0, 0)))
    out = pl.pallas_call(
        _conv_relu_kernel,
        out_shape=jax.ShapeDtypeStruct((Rp, Cout), jnp.bfloat16),
        grid=(Rp // T,),
        in_specs=[
            pl.BlockSpec((T, K), lambda i: (i, 0)),
            pl.BlockSpec((K, Cout), lambda i: (0, 0)),
            pl.BlockSpec((1, Cout), lambda i: (0, 0)),
        ],
        out_specs=pl.BlockSpec((T, Cout), lambda i: (i, 0)),
        compiler_params=pltpu.CompilerParams(dimension_semantics=("parallel",)),
    )(P, w_mat.astype(jnp.bfloat16), b.reshape(1, Cout).astype(jnp.float32))
    return out[:R].reshape(N, H, W, Cout)


def spade_norm_gamma_beta(x_nchw, actv_nhwc, wgb, bgb):
    # Fused: instance norm of x + gamma/beta 3x3 conv (in-kernel tap accumulation) + SPADE epilogue.
    # x_nchw: (N, Co, H, W) f32; actv_nhwc: (N, H, W, nhidden) bf16;
    # wgb: (9, nhidden, 2*Co) f32; bgb: (2*Co,) f32.
    N, H, W, C = actv_nhwc.shape
    Co = x_nchw.shape[1]
    Wp = W + 2
    LV = H * Wp                          # flattened output span (2 junk cols per row)
    LVp = _ceil_to(LV, 128)              # lane-aligned spatial extent
    NP = _ceil_to(2 * Co, 128)           # fused gamma|beta channels padded to a full lane tile
    Lfull = (H + 2) * Wp
    Lp = _ceil_to(2 * Wp + 2 + LVp, 8)   # enough rows for the largest tap shift (>= Lfull always)

    # Zero-padded activation, flattened spatial (row index = h_pad*(W+2)+w_pad), channel-last.
    ap = jnp.pad(actv_nhwc, ((0, 0), (1, 1), (1, 1), (0, 0))).reshape(N, Lfull, C)
    ap = jnp.pad(ap, ((0, 0), (0, Lp - Lfull), (0, 0)))

    wgbp = jnp.pad(wgb, ((0, 0), (0, 0), (0, NP - 2 * Co))).astype(jnp.bfloat16)
    bgbp = jnp.pad(bgb.reshape(1, 2 * Co), ((0, 0), (0, NP - 2 * Co))).astype(jnp.float32)

    # Raw x in NCHW-flat layout matching the padded-width flattening (zero pad columns/lanes).
    xv = jnp.pad(x_nchw.astype(jnp.float32), ((0, 0), (0, 0), (0, 0), (0, 2))).reshape(N, Co, LV)
    xv = jnp.pad(xv, ((0, 0), (0, 0), (0, LVp - LV)))

    kernel = functools.partial(_spade_kernel, wp=Wp, co=Co, lvp=LVp, hw=float(H * W))
    out = pl.pallas_call(
        kernel,
        out_shape=jax.ShapeDtypeStruct((N, Co, LVp), jnp.float32),
        grid=(N,),
        in_specs=[
            pl.BlockSpec((None, Lp, C), lambda n: (n, 0, 0)),
            pl.BlockSpec((9, C, NP), lambda n: (0, 0, 0)),
            pl.BlockSpec((1, NP), lambda n: (0, 0)),
            pl.BlockSpec((None, Co, LVp), lambda n: (n, 0, 0)),
        ],
        out_specs=pl.BlockSpec((None, Co, LVp), lambda n: (n, 0, 0)),
        compiler_params=pltpu.CompilerParams(dimension_semantics=("parallel",)),
    )(ap, wgbp, bgbp, xv)

    # Drop the 2 junk columns per row and the lane padding; already NCHW (no transpose).
    return out[:, :, :LV].reshape(N, Co, H, Wp)[:, :, :, :W]


def spade_forward(x, segmap, params):
    N, C, H, W = x.shape
    nhidden = params["w_shared"].shape[1]
    seg = nearest_resize_nchw(segmap, H, W)                         # NCHW (tiny channel count)
    seg_nhwc = jnp.transpose(seg, (0, 2, 3, 1))
    actv = conv3x3_relu(seg_nhwc, params["w_shared"], params["b_shared"])   # (N,H,W,nhidden) bf16
    wg = params["w_gamma"].reshape(9, nhidden, C)
    wb = params["w_beta"].reshape(9, nhidden, C)
    wgb = jnp.concatenate([wg, wb], axis=-1)                        # (9, nhidden, 2*C)
    bgb = jnp.concatenate([params["b_gamma"], params["b_beta"]])    # (2*C,)
    return spade_norm_gamma_beta(x, actv, wgb, bgb)


# --------------------------- pure-JAX reference ------------------------------

def spade_reference(x, segmap, params, label_nc, nhidden):
    mean = jnp.mean(x, axis=(2, 3), keepdims=True)
    var = jnp.var(x, axis=(2, 3), keepdims=True)
    normalized = (x - mean) * jax.lax.rsqrt(var + EPS)
    seg = nearest_resize_nchw(segmap, x.shape[2], x.shape[3])
    seg_nhwc = jnp.transpose(seg, (0, 2, 3, 1))

    def conv(inp, w_mat, b, cin):
        w = w_mat.reshape(3, 3, cin, -1)  # HWIO
        y = jax.lax.conv_general_dilated(
            inp, w, (1, 1), "SAME",
            dimension_numbers=("NHWC", "HWIO", "NHWC"), precision=HIGHEST)
        return y + b

    actv = jax.nn.relu(conv(seg_nhwc, params["w_shared"], params["b_shared"], label_nc))
    gamma = conv(actv, params["w_gamma"], params["b_gamma"], nhidden)
    beta = conv(actv, params["w_beta"], params["b_beta"], nhidden)
    norm_nhwc = jnp.transpose(normalized, (0, 2, 3, 1))
    out = norm_nhwc * (1.0 + gamma) + beta
    return jnp.transpose(out, (0, 3, 1, 2))


# --------------------------------- main --------------------------------------

if __name__ == "__main__":
    norm_nc, label_nc, nhidden = 4, 3, 128
    N, H, W = 2, 16, 16
    Hs, Ws = 8, 8  # segmap comes in smaller; nearest-upsampled to (H, W)

    key = jax.random.PRNGKey(0)
    kx, ks, k1, k2, k3, k4, k5, k6 = jax.random.split(key, 8)

    x = jax.random.normal(kx, (N, norm_nc, H, W), jnp.float32)
    segmap = jax.random.normal(ks, (N, label_nc, Hs, Ws), jnp.float32)

    # Conv weights stored as (3*3*Cin, Cout) matmul matrices, row order (dy, dx, cin) = HWIO reshape.
    params = {
        "w_shared": 0.2 * jax.random.normal(k1, (9 * label_nc, nhidden), jnp.float32),
        "b_shared": 0.1 * jax.random.normal(k2, (nhidden,), jnp.float32),
        "w_gamma": 0.02 * jax.random.normal(k3, (9 * nhidden, norm_nc), jnp.float32),
        "b_gamma": 0.1 * jax.random.normal(k4, (norm_nc,), jnp.float32),
        "w_beta": 0.02 * jax.random.normal(k5, (9 * nhidden, norm_nc), jnp.float32),
        "b_beta": 0.1 * jax.random.normal(k6, (norm_nc,), jnp.float32),
    }
    # TODO(synk): spectral_norm is imported but unused in the reference module's forward; not modeled.

    out = jax.block_until_ready(spade_forward(x, segmap, params))
    ref = jax.block_until_ready(spade_reference(x, segmap, params, label_nc, nhidden))

    assert out.shape == (N, norm_nc, H, W)
    assert bool(jnp.all(jnp.isfinite(out)))
    max_err = float(jnp.max(jnp.abs(out - ref)))
    assert max_err < 5e-2, f"mismatch vs reference: {max_err}"

    print("KERNEL_OK")
</pallas_src>

<mosaic_0001>
module attributes {stable_mosaic.version = 11 : i64} {
  func.func @_conv_relu_kernel(%arg0: i32, %arg1: memref<256x27xbf16, #tpu.memory_space<vmem>>, %arg2: memref<27x128xbf16, #tpu.memory_space<vmem>>, %arg3: memref<1x128xf32, #tpu.memory_space<vmem>>, %arg4: memref<256x128xbf16, #tpu.memory_space<vmem>>) attributes {dimension_semantics = [#tpu.dimension_semantics<parallel>], iteration_bounds = array<i64: 2>, scalar_prefetch = 0 : i64, scratch_operands = 0 : i64, tpu.core_type = #tpu.core_type<tc>, window_params = [{transform_indices = @transform_0, window_bounds = array<i64: 256, 27>}, {pipeline_mode = #tpu.pipeline_mode<synchronous>, transform_indices = @transform_1, window_bounds = array<i64: 27, 128>}, {pipeline_mode = #tpu.pipeline_mode<synchronous>, transform_indices = @transform_2, window_bounds = array<i64: 1, 128>}, {transform_indices = @transform_3, window_bounds = array<i64: 256, 128>}]} {
    %c0 = arith.constant 0 : index
    %c0_0 = arith.constant 0 : index
    %0 = vector.load %arg1[%c0, %c0_0] : memref<256x27xbf16, #tpu.memory_space<vmem>>, vector<256x27xbf16>
    %c0_1 = arith.constant 0 : index
    %c0_2 = arith.constant 0 : index
    %1 = vector.load %arg2[%c0_1, %c0_2] : memref<27x128xbf16, #tpu.memory_space<vmem>>, vector<27x128xbf16>
    %cst = arith.constant dense<0.000000e+00> : vector<256x128xf32>
    %2 = tpu.matmul %0, %1, %cst {dimension_numbers = #tpu.dot_dimension_numbers<[1], [0], [0], [1], [0, 0, 1, 1], [], []>} : vector<256x27xbf16>, vector<27x128xbf16>, vector<256x128xf32> -> vector<256x128xf32>
    %c0_3 = arith.constant 0 : index
    %c0_4 = arith.constant 0 : index
    %3 = vector.load %arg3[%c0_3, %c0_4] : memref<1x128xf32, #tpu.memory_space<vmem>>, vector<1x128xf32>
    %4 = vector.broadcast %3 : vector<1x128xf32> to vector<256x128xf32>
    %5 = arith.addf %2, %4 : vector<256x128xf32>
    %cst_5 = arith.constant 0.000000e+00 : f32
    %6 = vector.broadcast %cst_5 : f32 to vector<256x128xf32>
    %7 = arith.maximumf %5, %6 : vector<256x128xf32>
    %8 = arith.truncf %7 : vector<256x128xf32> to vector<256x128xbf16>
    %c0_6 = arith.constant 0 : index
    %c0_7 = arith.constant 0 : index
    %9 = vector.load %arg4[%c0_6, %c0_7] : memref<256x128xbf16, #tpu.memory_space<vmem>>, vector<256x128xbf16>
    tpu.vector_store %arg4[%c0_6, %c0_7], %8 {strides = array<i32>} : memref<256x128xbf16, #tpu.memory_space<vmem>>, vector<256x128xbf16>,
    return
  }
  func.func @transform_0(%arg0: i32) -> (i32, i32) {
    %c0_i32 = arith.constant 0 : i32
    %c0_i32_0 = arith.constant 0 : i32
    return %arg0, %c0_i32 : i32, i32
  }
  func.func @transform_1(%arg0: i32) -> (i32, i32) {
    %c0_i32 = arith.constant 0 : i32
    %c0_i32_0 = arith.constant 0 : i32
    %c0_i32_1 = arith.constant 0 : i32
    return %c0_i32, %c0_i32_0 : i32, i32
  }
  func.func @transform_2(%arg0: i32) -> (i32, i32) {
    %c0_i32 = arith.constant 0 : i32
    %c0_i32_0 = arith.constant 0 : i32
    %c0_i32_1 = arith.constant 0 : i32
    return %c0_i32, %c0_i32_0 : i32, i32
  }
  func.func @transform_3(%arg0: i32) -> (i32, i32) {
    %c0_i32 = arith.constant 0 : i32
    %c0_i32_0 = arith.constant 0 : i32
    return %arg0, %c0_i32 : i32, i32
  }
}

</mosaic_0001>

<llo_original>
// kernel: tpu_custom_call.1
$region0: #{tpu_custom_call.1}
  #allocation0 [shape = 'u32[]', space=smem, size = 0x4, offset = 0x4, fixed_abs, tag = 'smem constant byte address 0x4 - core index']
  #allocation1 [shape = 'u32[144,128]{1,0:T(1,128)}', space=vmem, size = 0x12000, scoped, tag = 'internal scratch']
  %s0 = inlined_call_operand.vmem [shape: bf16[512,27], index: 0, kind: input, shape index: {}]
  %s1 = inlined_call_operand.vmem [shape: bf16[27,128], index: 1, kind: input, shape index: {}]
  %s2 = inlined_call_operand.vmem [shape: f32[1,128], index: 2, kind: input, shape index: {}]
  %s3 = inlined_call_operand.hbm [shape: bf16[512,128], index: 3, kind: output, shape index: {}]
  %s4 = sld [smem:[#allocation0]]
  $region45: #{tpu_custom_call.1} parent=0
    _
  %s6 = ssub.s32 1, %s4
  %s7 = scalar_select 0, %s6, %s4
  $region1: #{tpu_custom_call.1} parent=0
    #allocation2 [shape = 'u8[131072]{0}', space=vmem, size = 0x20000, scoped, tag = 'output window, operand 0']
    #allocation3 [shape = 's32[2]{0}', space=sflag, size = 0x8, scoped, tag = 'scoped memory for tpu_custom_call.1']
    %8 = vsyncpa [#allocation3], 0
    %s9 = scalar_lea.sflag [#allocation3], 1
    %10 = vsyncpa %s9, 0
    loop: start=0, step=1, limit=4
    $region2: #{tpu_custom_call.1} parent=1 // loop_pre_header
      _
    $region3: #{tpu_custom_call.1} parent=1 // loop_header
      %s12 = sphi 0, %s16
      %p13 = scmp.ge.s32.totalorder %s12, 4
      %s22 = sphi 0, %s24
      %s25 = sphi 0, %s22
      %s26 = sphi 0, %s25
      %s42 = sphi 0, %s26
      %s46 = sphi 0, %s46
      %s48 = sphi 0, %s46
      %s49 = sphi 0, %s48
      %s63 = sphi 0, %s49
      %s67 = sphi 0, %s67
      %s69 = sphi 0, %s67
      %s70 = sphi 0, %s69
      %s84 = sphi 0, %s70
      %s90 = sphi 0, %s92
      %s93 = sphi 0, %s90
      %s94 = sphi 0, %s93
      %s110 = sphi 0, %s94
    $region4: #{tpu_custom_call.1} parent=1 // loop_header_branch
      %15 = sbr.rel (%p13) target = $region8
    $region5: #{tpu_custom_call.1} parent=1 // loop_body
      %s17 = ssub.s32 %s12, 1
      %s18 = ssub.s32 %s12, 2
      %s19 = sadd.s32 %s12, 1
      %s20 = ssub.s32 %s12, %s19
      %p21 = scmp.eq.s32.totalorder %s20, 0
      %s23 = sadd.s32 %s22, 1
      %s24 = scalar_select %p21, %s22, %s23
      %p27 = pneg %p21
      %p28 = scmp.eq.s32.totalorder %s12, 1
      %p29 = por %p27, %p28
      %p30 = scmp.ne.s32.totalorder %s22, %s25
      %p31 = scmp.eq.s32.totalorder %s12, 0
      %p32 = por %p30, %p31
      %p33 = scmp.ne.s32.totalorder %s22, %s25
      %p34 = scmp.eq.s32.totalorder %s17, 1
      %p35 = por %p33, %p34
      %p36 = scmp.ne.s32.totalorder %s25, %s26
      %p37 = scmp.eq.s32.totalorder %s17, 0
      %p38 = por %p36, %p37
      %p39 = scmp.ne.s32.totalorder %s25, %s26
      %p40 = scmp.eq.s32.totalorder %s18, 1
      %p41 = por %p39, %p40
      %p43 = scmp.ne.s32.totalorder %s26, %s42
      %p44 = scmp.eq.s32.totalorder %s18, 0
      %p45 = por %p43, %p44
      %s47 = sadd.s32 %s46, 1
      %p50 = scmp.eq.s32.totalorder %s12, 1
      %p51 = scmp.ne.s32.totalorder %s46, %s48
      %p52 = scmp.eq.s32.totalorder %s12, 0
      %p53 = por %p51, %p52
      %p54 = scmp.ne.s32.totalorder %s46, %s48
      %p55 = scmp.eq.s32.totalorder %s17, 1
      %p56 = por %p54, %p55
      %p57 = scmp.ne.s32.totalorder %s48, %s49
      %p58 = scmp.eq.s32.totalorder %s17, 0
      %p59 = por %p57, %p58
      %p60 = scmp.ne.s32.totalorder %s48, %s49
      %p61 = scmp.eq.s32.totalorder %s18, 1
      %p62 = por %p60, %p61
      %p64 = scmp.ne.s32.totalorder %s49, %s63
      %p65 = scmp.eq.s32.totalorder %s18, 0
      %p66 = por %p64, %p65
      %s68 = sadd.s32 %s67, 1
      %p71 = scmp.eq.s32.totalorder %s12, 1
      %p72 = scmp.ne.s32.totalorder %s67, %s69
      %p73 = scmp.eq.s32.totalorder %s12, 0
      %p74 = por %p72, %p73
      %p75 = scmp.ne.s32.totalorder %s67, %s69
      %p76 = scmp.eq.s32.totalorder %s17, 1
      %p77 = por %p75, %p76
      %p78 = scmp.ne.s32.totalorder %s69, %s70
      %p79 = scmp.eq.s32.totalorder %s17, 0
      %p80 = por %p78, %p79
      %p81 = scmp.ne.s32.totalorder %s69, %s70
      %p82 = scmp.eq.s32.totalorder %s18, 1
      %p83 = por %p81, %p82
      %p85 = scmp.ne.s32.totalorder %s70, %s84
      %p86 = scmp.eq.s32.totalorder %s18, 0
      %p87 = por %p85, %p86
      %s88 = ssub.s32 %s12, %s19
      %p89 = scmp.eq.s32.totalorder %s88, 0
      %s91 = sadd.s32 %s90, 1
      %s92 = scalar_select %p89, %s90, %s91
      %p95 = pneg %p89
      %p96 = scmp.eq.s32.totalorder %s12, 1
      %p97 = por %p95, %p96
      %p98 = scmp.ne.s32.totalorder %s90, %s93
      %p99 = scmp.eq.s32.totalorder %s12, 0
      %p100 = por %p98, %p99
      %p101 = scmp.ne.s32.totalorder %s90, %s93
      %p102 = scmp.eq.s32.totalorder %s17, 1
      %p103 = por %p101, %p102
      %p104 = scmp.ne.s32.totalorder %s93, %s94
      %p105 = scmp.eq.s32.totalorder %s17, 0
      %p106 = por %p104, %p105
      %p107 = scmp.ne.s32.totalorder %s93, %s94
      %p108 = scmp.eq.s32.totalorder %s18, 1
      %p109 = por %p107, %p108
      %p111 = scmp.ne.s32.totalorder %s94, %s110
      %p112 = scmp.eq.s32.totalorder %s18, 0
      %p113 = por %p111, %p112
      %p114 = scmp.le.s32.totalorder 1, %s12
      %p115 = scmp.lt.s32.totalorder %s12, 3
      %p116 = pnand %p114, %p115
      %p117 = pneg %p116
      // Predicated region
      $region9: #{tpu_custom_call.1} parent=5 // pred_check
        _
      $region10: #{tpu_custom_call.1} parent=5 // pred_check_branch
        %119 = sbr.rel (%p116) target = $region12
      $region11: #{tpu_custom_call.1} parent=5 // pred_region
        %s120 = ssub.s32 %s12, 1
        // Predicated region
        $region13: #{tpu_custom_call.1} parent=11 // pred_check
          %p121 = pneg %p59
        $region14: #{tpu_custom_call.1} parent=11 // pred_check_branch
          %123 = sbr.rel (%p121) target = $region16
        $region15: #{tpu_custom_call.1} parent=11 // pred_region
          _
        $region16: #{tpu_custom_call.1} parent=11 // pred_fallthru
          _
        // Predicated region
        $region17: #{tpu_custom_call.1} parent=11 // pred_check
          %p124 = pneg %p80
        $region18: #{tpu_custom_call.1} parent=11 // pred_check_branch
          %126 = sbr.rel (%p124) target = $region20
        $region19: #{tpu_custom_call.1} parent=11 // pred_region
          _
        $region20: #{tpu_custom_call.1} parent=11 // pred_fallthru
          _
      $region12: #{tpu_custom_call.1} parent=5 // pred_fallthru
        _
      %p127 = scmp.lt.s32.totalorder %s12, 2
      // Predicated region
      $region21: #{tpu_custom_call.1} parent=5 // pred_check
        %p128 = pneg %p127
      $region22: #{tpu_custom_call.1} parent=5 // pred_check_branch
        %130 = sbr.rel (%p128) target = $region24
      $region23: #{tpu_custom_call.1} parent=5 // pred_region
        // Predicated region
        $region25: #{tpu_custom_call.1} parent=23 // pred_check
          %p131 = pneg %p32
        $region26: #{tpu_custom_call.1} parent=23 // pred_check_branch
          %133 = sbr.rel (%p131) target = $region28
        $region27: #{tpu_custom_call.1} parent=23 // pred_region
          %s134 = smul.u32 32, %s12
          %p135 = scmp.lt.s32.totalorder %s134, 63
          %s136 = scalar_select %p135, %s134, 63
          %s137 = smul.addr %s136, 4
          %s138 = scalar_lea.vmem %s0, %s137
          %s139 = smul.u32 32, %s12
        $region28: #{tpu_custom_call.1} parent=23 // pred_fallthru
          _
      $region24: #{tpu_custom_call.1} parent=5 // pred_fallthru
        _
      %p140 = scmp.le.s32.totalorder 1, %s12
      %p141 = scmp.lt.s32.totalorder %s12, 3
      %p142 = pnand %p140, %p141
      %p143 = pneg %p142
      // Predicated region
      $region29: #{tpu_custom_call.1} parent=5 // pred_check
        _
      $region30: #{tpu_custom_call.1} parent=5 // pred_check_branch
        %145 = sbr.rel (%p142) target = $region32
      $region31: #{tpu_custom_call.1} parent=5 // pred_region
        %s146 = ssub.s32 %s12, 1
        %s147 = smul.u32 32, %s17
        %p148 = scmp.lt.s32.totalorder %s147, 63
        %s149 = scalar_select %p148, %s147, 63
        %s150 = smul.addr %s149, 4
        %s151 = scalar_lea.vmem %s0, %s150
        %p152 = pneg %p38
        %p153 = pneg %p35
        %p154 = pneg %p59
        %p155 = pneg %p56
        %p156 = pneg %p80
        %p157 = pneg %p77
        %p158 = pneg %p106
        %p159 = pneg %p103
        %s160 = sand.u32 %s93, 1
        %s161 = scalar_lea.sflag [#allocation3], %s160
        %s162 = sand.u32 %s93, 1
        %s163 = smul.addr %s162, 128
        %s164 = scalar_lea.vmem [#allocation2], %s163
        %s165 = smul.u32 32, %s17
        %p166 = scmp.lt.s32.totalorder %s165, 63
        %s167 = scalar_select %p166, %s165, 63
        %s168 = smul.addr %s167, 4
        %s169 = scalar_lea.vmem %s0, %s168
        %s170 = smul.u32 32, %s17
        %s171 = smul.u32 32, %s17
        %v173 = vld [vmem:[%s169] sm:$0xf]
        %v174 = vld [vmem:[%s169 + $0x4] sm:$0xf]
        %v175 = vld [vmem:[%s169 + $0x8] sm:$0xf]
        %v176 = vld [vmem:[%s169 + $0xc] sm:$0xf]
        %v177 = vld [vmem:[%s169 + $0x10] sm:$0xf]
        %v178 = vld [vmem:[%s169 + $0x14] sm:$0xf]
        %v179 = vld [vmem:[%s169 + $0x18] sm:$0xf]
        %v180 = vld [vmem:[%s169 + $0x1c] sm:$0xf]
        %v181 = vld [vmem:[%s169 + $0x20] sm:$0xf]
        %v182 = vld [vmem:[%s169 + $0x24] sm:$0xf]
        %v183 = vld [vmem:[%s169 + $0x28] sm:$0xf]
        %v184 = vld [vmem:[%s169 + $0x2c] sm:$0xf]
        %v185 = vld [vmem:[%s169 + $0x30] sm:$0xf]
        %v186 = vld [vmem:[%s169 + $0x34] sm:$0xf]
        %v187 = vld [vmem:[%s169 + $0x38] sm:$0xf]
        %v188 = vld [vmem:[%s169 + $0x3c] sm:$0xf]
        %v189 = vld [vmem:[%s169 + $0x40] sm:$0xf]
        %v190 = vld [vmem:[%s169 + $0x44] sm:$0xf]
        %v191 = vld [vmem:[%s169 + $0x48] sm:$0xf]
        %v192 = vld [vmem:[%s169 + $0x4c] sm:$0xf]
        %v193 = vld [vmem:[%s169 + $0x50] sm:$0xf]
        %v194 = vld [vmem:[%s169 + $0x54] sm:$0xf]
        %v195 = vld [vmem:[%s169 + $0x58] sm:$0xf]
        %v196 = vld [vmem:[%s169 + $0x5c] sm:$0xf]
        %v197 = vld [vmem:[%s169 + $0x60] sm:$0xf]
        %v198 = vld [vmem:[%s169 + $0x64] sm:$0xf]
        %v199 = vld [vmem:[%s169 + $0x68] sm:$0xf]
        %v200 = vld [vmem:[%s169 + $0x6c] sm:$0xf]
        %v201 = vld [vmem:[%s169 + $0x70] sm:$0xf]
        %v202 = vld [vmem:[%s169 + $0x74] sm:$0xf]
        %v203 = vld [vmem:[%s169 + $0x78] sm:$0xf]
        %v204 = vld [vmem:[%s169 + $0x7c] sm:$0xf]
        %v205 = vld [vmem:[%s1] sm:$0xf]
        %v206 = vld [vmem:[%s1 + $0x4] sm:$0xf]
        %v207 = vld [vmem:[%s1 + $0x8] sm:$0xf]
        %v208 = vld [vmem:[%s1 + $0xc] sm:$0x3]
        %v209 = vld [vmem:[%s2] sm:$0x1]
        %v211 = vlaneseq
        %v212 = vshrl.u32 %v211, 7
        %v213 = vsub.s32 0, %v212
        %v214 = vrot.slane %v209, %v213
        %v248 = vunpack.c.l.b16 %v173
        %v249 = vunpack.c.l.b16 %v174
        %v250 = vunpack.c.l.b16 %v175
        %v251 = vunpack.c.l.b16 %v176
        %v252 = vunpack.c.l.b16 %v177
        %v253 = vunpack.c.l.b16 %v178
        %v254 = vunpack.c.l.b16 %v179
        %v255 = vunpack.c.l.b16 %v180
        %v256 = vunpack.c.l.b16 %v181
        %v257 = vunpack.c.l.b16 %v182
        %v258 = vunpack.c.l.b16 %v183
        %v259 = vunpack.c.l.b16 %v184
        %v260 = vunpack.c.l.b16 %v185
        %v261 = vunpack.c.l.b16 %v186
        %v262 = vunpack.c.l.b16 %v187
        %v263 = vunpack.c.l.b16 %v188
        %v264 = vunpack.c.l.b16 %v189
        %v265 = vunpack.c.l.b16 %v190
        %v266 = vunpack.c.l.b16 %v191
        %v267 = vunpack.c.l.b16 %v192
        %v268 = vunpack.c.l.b16 %v193
        %v269 = vunpack.c.l.b16 %v194
        %v270 = vunpack.c.l.b16 %v195
        %v271 = vunpack.c.l.b16 %v196
        %v272 = vunpack.c.l.b16 %v197
        %v273 = vunpack.c.l.b16 %v198
        %v274 = vunpack.c.l.b16 %v199
        %v275 = vunpack.c.l.b16 %v200
        %v276 = vunpack.c.l.b16 %v201
        %v277 = vunpack.c.l.b16 %v202
        %v278 = vunpack.c.l.b16 %v203
        %v279 = vunpack.c.l.b16 %v204
        %v280 = vpack.c.b16 %v249, %v248
        %v281 = vpack.c.b16 %v251, %v250
        %v282 = vpack.c.b16 %v253, %v252
        %v283 = vpack.c.b16 %v255, %v254
        %v284 = vpack.c.b16 %v257, %v256
        %v285 = vpack.c.b16 %v259, %v258
        %v286 = vpack.c.b16 %v261, %v260
        %v287 = vpack.c.b16 %v263, %v262
        %v288 = vpack.c.b16 %v265, %v264
        %v289 = vpack.c.b16 %v267, %v266
        %v290 = vpack.c.b16 %v269, %v268
        %v291 = vpack.c.b16 %v271, %v270
        %v292 = vpack.c.b16 %v273, %v272
        %v293 = vpack.c.b16 %v275, %v274
        %v294 = vpack.c.b16 %v277, %v276
        %v295 = vpack.c.b16 %v279, %v278
        %v300 = vunpack.c.l.b16 %v205
        %v301 = vunpack.c.l.b16 %v206
        %v302 = vunpack.c.l.b16 %v207
        %v303 = vunpack.c.l.b16 %v208
        %v304 = vpack.c.b16 %v301, %v300
        %v305 = vpack.c.b16 %v303, %v302
        %vm307 = vcmask 220160
        %v309 = vsel %vm307, %v280, 0
        %v312 = vsel %vm307, %v281, 0
        %v315 = vsel %vm307, %v282, 0
        %v318 = vsel %vm307, %v283, 0
        %v321 = vsel %vm307, %v284, 0
        %v324 = vsel %vm307, %v285, 0
        %v327 = vsel %vm307, %v286, 0
        %v330 = vsel %vm307, %v287, 0
        %v333 = vsel %vm307, %v288, 0
        %v336 = vsel %vm307, %v289, 0
        %v339 = vsel %vm307, %v290, 0
        %v342 = vsel %vm307, %v291, 0
        %v345 = vsel %vm307, %v292, 0
        %v348 = vsel %vm307, %v293, 0
        %v351 = vsel %vm307, %v294, 0
        %v354 = vsel %vm307, %v295, 0
        %vm356 = vcmask 1044480
        %vm357 = vcmask 1045504
        %v358 = vsel %vm356, 4294967295, 65535
        %v359 = vsel %vm357, %v358, 0
        %v361 = vand.u32 %v305, %v359
        %363 = vmatprep.subr.bf16.mxu0 0
        %364 = vmatpush1.bf16.msra.mxu0 %v304
        %365 = vmatprep.subr.bf16.mxu0 0
        %366 = vmatpush1.bf16.msra.mxu0 %v361
        %367 = vmatprep.subr.bf16.mxu0 0
        %368 = vmatpush1.bf16.msra.mxu0 0
        %369 = vmatprep.subr.bf16.mxu0 0
        %370 = vmatpush1.bf16.msra.mxu0 0
        %371 = vmatprep.subr.bf16.mxu0 0
        %372 = vmatpush1.bf16.msra.mxu0 0
        %373 = vmatprep.subr.bf16.mxu0 0
        %374 = vmatpush1.bf16.msra.mxu0 0
        %375 = vmatprep.subr.bf16.mxu0 0
        %376 = vmatpush1.bf16.msra.mxu0 0
        %377 = vmatprep.subr.bf16.mxu0 0
        %378 = vmatpush1.bf16.msra.mxu0 0
        %379 = vmatprep.subr.bf16.mxu0 0
        %380 = vmatpush1.bf16.msra.mxu0 0
        %381 = vmatprep.subr.bf16.mxu0 0
        %382 = vmatpush1.bf16.msra.mxu0 0
        %383 = vmatprep.subr.bf16.mxu0 0
        %384 = vmatpush1.bf16.msra.mxu0 0
        %385 = vmatprep.subr.bf16.mxu0 0
        %386 = vmatpush1.bf16.msra.mxu0 0
        %387 = vmatprep.subr.bf16.mxu0 0
        %388 = vmatpush1.bf16.msra.mxu0 0
        %389 = vmatprep.subr.bf16.mxu0 0
        %390 = vmatpush1.bf16.msra.mxu0 0
        %391 = vmatprep.subr.bf16.mxu0 0
        %392 = vmatpush1.bf16.msra.mxu0 0
        %393 = vmatprep.subr.bf16.mxu0 0
        %394 = vmatpush1.bf16.msra.mxu0 0
        %395 = vmatprep.mubr.bf16.mxu0 0
        %396 = vmatmul.mubr.bf16.gmra.mrb[0].mxu0 %v309
        %v397 = vpop.f32.mrb[0].mxu0
        %v398 = vadd.f32 %v214, %v397
        %v399 = vpop.f32.mrb[0].mxu0
        %v400 = vpop.f32.mrb[0].mxu0
        %v401 = vadd.f32 %v214, %v400
        %v402 = vpop.f32.mrb[0].mxu0
        %403 = vmatprep.mubr.bf16.mxu0 0
        %404 = vmatmul.mubr.bf16.gmra.mrb[0].mxu0 %v312
        %v405 = vpop.f32.mrb[0].mxu0
        %v406 = vadd.f32 %v214, %v405
        %v407 = vpop.f32.mrb[0].mxu0
        %v408 = vpop.f32.mrb[0].mxu0
        %v409 = vadd.f32 %v214, %v408
        %v410 = vpop.f32.mrb[0].mxu0
        %411 = vmatprep.mubr.bf16.mxu0 0
        %412 = vmatmul.mubr.bf16.gmra.mrb[0].mxu0 %v315
        %v413 = vpop.f32.mrb[0].mxu0
        %v414 = vadd.f32 %v214, %v413
        %v415 = vpop.f32.mrb[0].mxu0
        %v416 = vpop.f32.mrb[0].mxu0
        %v417 = vadd.f32 %v214, %v416
        %v418 = vpop.f32.mrb[0].mxu0
        %419 = vmatprep.mubr.bf16.mxu0 0
        %420 = vmatmul.mubr.bf16.gmra.mrb[0].mxu0 %v318
        %v421 = vpop.f32.mrb[0].mxu0
        %v422 = vadd.f32 %v214, %v421
        %v423 = vpop.f32.mrb[0].mxu0
        %v424 = vpop.f32.mrb[0].mxu0
        %v425 = vadd.f32 %v214, %v424
        %v426 = vpop.f32.mrb[0].mxu0
        %427 = vmatprep.mubr.bf16.mxu0 0
        %428 = vmatmul.mubr.bf16.gmra.mrb[0].mxu0 %v321
        %v429 = vpop.f32.mrb[0].mxu0
        %v430 = vadd.f32 %v214, %v429
        %v431 = vpop.f32.mrb[0].mxu0
        %v432 = vpop.f32.mrb[0].mxu0
        %v433 = vadd.f32 %v214, %v432
        %v434 = vpop.f32.mrb[0].mxu0
        %435 = vmatprep.mubr.bf16.mxu0 0
        %436 = vmatmul.mubr.bf16.gmra.mrb[0].mxu0 %v324
        %v437 = vpop.f32.mrb[0].mxu0
        %v438 = vadd.f32 %v214, %v437
        %v439 = vpop.f32.mrb[0].mxu0
        %v440 = vpop.f32.mrb[0].mxu0
        %v441 = vadd.f32 %v214, %v440
        %v442 = vpop.f32.mrb[0].mxu0
        %443 = vmatprep.mubr.bf16.mxu0 0
        %444 = vmatmul.mubr.bf16.gmra.mrb[0].mxu0 %v327
        %v445 = vpop.f32.mrb[0].mxu0
        %v446 = vadd.f32 %v214, %v445
        %v447 = vpop.f32.mrb[0].mxu0
        %v448 = vpop.f32.mrb[0].mxu0
        %v449 = vadd.f32 %v214, %v448
        %v450 = vpop.f32.mrb[0].mxu0
        %451 = vmatprep.mubr.bf16.mxu0 0
        %452 = vmatmul.mubr.bf16.gmra.mrb[0].mxu0 %v330
        %v453 = vpop.f32.mrb[0].mxu0
        %v454 = vadd.f32 %v214, %v453
        %v455 = vpop.f32.mrb[0].mxu0
        %v456 = vpop.f32.mrb[0].mxu0
        %v457 = vadd.f32 %v214, %v456
        %v458 = vpop.f32.mrb[0].mxu0
        %459 = vmatprep.mubr.bf16.mxu0 0
        %460 = vmatmul.mubr.bf16.gmra.mrb[0].mxu0 %v333
        %v461 = vpop.f32.mrb[0].mxu0
        %v462 = vadd.f32 %v214, %v461
        %v463 = vpop.f32.mrb[0].mxu0
        %v464 = vpop.f32.mrb[0].mxu0
        %v465 = vadd.f32 %v214, %v464
        %v466 = vpop.f32.mrb[0].mxu0
        %467 = vmatprep.mubr.bf16.mxu0 0
        %468 = vmatmul.mubr.bf16.gmra.mrb[0].mxu0 %v336
        %v469 = vpop.f32.mrb[0].mxu0
        %v470 = vadd.f32 %v214, %v469
        %v471 = vpop.f32.mrb[0].mxu0
        %v472 = vpop.f32.mrb[0].mxu0
        %v473 = vadd.f32 %v214, %v472
        %v474 = vpop.f32.mrb[0].mxu0
        %475 = vmatprep.mubr.bf16.mxu0 0
        %476 = vmatmul.mubr.bf16.gmra.mrb[0].mxu0 %v339
        %v477 = vpop.f32.mrb[0].mxu0
        %v478 = vadd.f32 %v214, %v477
        %v479 = vpop.f32.mrb[0].mxu0
        %v480 = vpop.f32.mrb[0].mxu0
        %v481 = vadd.f32 %v214, %v480
        %v482 = vpop.f32.mrb[0].mxu0
        %483 = vmatprep.mubr.bf16.mxu0 0
        %484 = vmatmul.mubr.bf16.gmra.mrb[0].mxu0 %v342
        %v485 = vpop.f32.mrb[0].mxu0
        %v486 = vadd.f32 %v214, %v485
        %v487 = vpop.f32.mrb[0].mxu0
        %v488 = vpop.f32.mrb[0].mxu0
        %v489 = vadd.f32 %v214, %v488
        %v490 = vpop.f32.mrb[0].mxu0
        %491 = vmatprep.mubr.bf16.mxu0 0
        %492 = vmatmul.mubr.bf16.gmra.mrb[0].mxu0 %v345
        %v493 = vpop.f32.mrb[0].mxu0
        %v494 = vadd.f32 %v214, %v493
        %v495 = vpop.f32.mrb[0].mxu0
        %v496 = vpop.f32.mrb[0].mxu0
        %v497 = vadd.f32 %v214, %v496
        %v498 = vpop.f32.mrb[0].mxu0
        %499 = vmatprep.mubr.bf16.mxu0 0
        %500 = vmatmul.mubr.bf16.gmra.mrb[0].mxu0 %v348
        %v501 = vpop.f32.mrb[0].mxu0
        %v502 = vadd.f32 %v214, %v501
        %v503 = vpop.f32.mrb[0].mxu0
        %v504 = vpop.f32.mrb[0].mxu0
        %v505 = vadd.f32 %v214, %v504
        %v506 = vpop.f32.mrb[0].mxu0
        %507 = vmatprep.mubr.bf16.mxu0 0
        %508 = vmatmul.mubr.bf16.gmra.mrb[0].mxu0 %v351
        %v509 = vpop.f32.mrb[0].mxu0
        %v510 = vadd.f32 %v214, %v509
        %v511 = vpop.f32.mrb[0].mxu0
        %v512 = vpop.f32.mrb[0].mxu0
        %v513 = vadd.f32 %v214, %v512
        %v514 = vpop.f32.mrb[0].mxu0
        %515 = vmatprep.mubr.bf16.mxu0 0
        %516 = vmatmul.mubr.bf16.gmra.mrb[0].mxu0 %v354
        %v517 = vpop.f32.mrb[0].mxu0
        %v518 = vadd.f32 %v214, %v517
        %v519 = vpop.f32.mrb[0].mxu0
        %v520 = vpop.f32.mrb[0].mxu0
        %v521 = vadd.f32 %v214, %v520
        %v522 = vpop.f32.mrb[0].mxu0
        %523 = vdwg.mxu0
        %v524 = vmax.f32 %v398, 0.0
        %v525 = vmax.f32 %v401, 0.0
        %v526 = vmax.f32 %v406, 0.0
        %v527 = vmax.f32 %v409, 0.0
        %v528 = vmax.f32 %v414, 0.0
        %v529 = vmax.f32 %v417, 0.0
        %v530 = vmax.f32 %v422, 0.0
        %v531 = vmax.f32 %v425, 0.0
        %v532 = vmax.f32 %v430, 0.0
        %v533 = vmax.f32 %v433, 0.0
        %v534 = vmax.f32 %v438, 0.0
        %v535 = vmax.f32 %v441, 0.0
        %v536 = vmax.f32 %v446, 0.0
        %v537 = vmax.f32 %v449, 0.0
        %v538 = vmax.f32 %v454, 0.0
        %v539 = vmax.f32 %v457, 0.0
        %v540 = vmax.f32 %v462, 0.0
        %v541 = vmax.f32 %v465, 0.0
        %v542 = vmax.f32 %v470, 0.0
        %v543 = vmax.f32 %v473, 0.0
        %v544 = vmax.f32 %v478, 0.0
        %v545 = vmax.f32 %v481, 0.0
        %v546 = vmax.f32 %v486, 0.0
        %v547 = vmax.f32 %v489, 0.0
        %v548 = vmax.f32 %v494, 0.0
        %v549 = vmax.f32 %v497, 0.0
        %v550 = vmax.f32 %v502, 0.0
        %v551 = vmax.f32 %v505, 0.0
        %v552 = vmax.f32 %v510, 0.0
        %v553 = vmax.f32 %v513, 0.0
        %v554 = vmax.f32 %v518, 0.0
        %v555 = vmax.f32 %v521, 0.0
        %v556 = vpack.c.bf16 %v525, %v524
        %v557 = vpack.c.bf16 %v527, %v526
        %v558 = vpack.c.bf16 %v529, %v528
        %v559 = vpack.c.bf16 %v531, %v530
        %v560 = vpack.c.bf16 %v533, %v532
        %v561 = vpack.c.bf16 %v535, %v534
        %v562 = vpack.c.bf16 %v537, %v536
        %v563 = vpack.c.bf16 %v539, %v538
        %v564 = vpack.c.bf16 %v541, %v540
        %v565 = vpack.c.bf16 %v543, %v542
        %v566 = vpack.c.bf16 %v545, %v544
        %v567 = vpack.c.bf16 %v547, %v546
        %v568 = vpack.c.bf16 %v549, %v548
        %v569 = vpack.c.bf16 %v551, %v550
        %v570 = vpack.c.bf16 %v553, %v552
        %v571 = vpack.c.bf16 %v555, %v554
        %v588 = vunpack.c.l.b16 %v556
        %v589 = vunpack.c.h.b16 %v556
        %v590 = vunpack.c.l.b16 %v557
        %v591 = vunpack.c.h.b16 %v557
        %v592 = vunpack.c.l.b16 %v558
        %v593 = vunpack.c.h.b16 %v558
        %v594 = vunpack.c.l.b16 %v559
        %v595 = vunpack.c.h.b16 %v559
        %v596 = vunpack.c.l.b16 %v560
        %v597 = vunpack.c.h.b16 %v560
        %v598 = vunpack.c.l.b16 %v561
        %v599 = vunpack.c.h.b16 %v561
        %v600 = vunpack.c.l.b16 %v562
        %v601 = vunpack.c.h.b16 %v562
        %v602 = vunpack.c.l.b16 %v563
        %v603 = vunpack.c.h.b16 %v563
        %v604 = vunpack.c.l.b16 %v564
        %v605 = vunpack.c.h.b16 %v564
        %v606 = vunpack.c.l.b16 %v565
        %v607 = vunpack.c.h.b16 %v565
        %v608 = vunpack.c.l.b16 %v566
        %v609 = vunpack.c.h.b16 %v566
        %v610 = vunpack.c.l.b16 %v567
        %v611 = vunpack.c.h.b16 %v567
        %v612 = vunpack.c.l.b16 %v568
        %v613 = vunpack.c.h.b16 %v568
        %v614 = vunpack.c.l.b16 %v569
        %v615 = vunpack.c.h.b16 %v569
        %v616 = vunpack.c.l.b16 %v570
        %v617 = vunpack.c.h.b16 %v570
        %v618 = vunpack.c.l.b16 %v571
        %v619 = vunpack.c.h.b16 %v571
        %v620 = vpack.c.b16 %v588, %v588
        %v621 = vpack.c.b16 %v589, %v589
        %v622 = vpack.c.b16 %v590, %v590
        %v623 = vpack.c.b16 %v591, %v591
        %v624 = vpack.c.b16 %v592, %v592
        %v625 = vpack.c.b16 %v593, %v593
        %v626 = vpack.c.b16 %v594, %v594
        %v627 = vpack.c.b16 %v595, %v595
        %v628 = vpack.c.b16 %v596, %v596
        %v629 = vpack.c.b16 %v597, %v597
        %v630 = vpack.c.b16 %v598, %v598
        %v631 = vpack.c.b16 %v599, %v599
        %v632 = vpack.c.b16 %v600, %v600
        %v633 = vpack.c.b16 %v601, %v601
        %v634 = vpack.c.b16 %v602, %v602
        %v635 = vpack.c.b16 %v603, %v603
        %v636 = vpack.c.b16 %v604, %v604
        %v637 = vpack.c.b16 %v605, %v605
        %v638 = vpack.c.b16 %v606, %v606
        %v639 = vpack.c.b16 %v607, %v607
        %v640 = vpack.c.b16 %v608, %v608
        %v641 = vpack.c.b16 %v609, %v609
        %v642 = vpack.c.b16 %v610, %v610
        %v643 = vpack.c.b16 %v611, %v611
        %v644 = vpack.c.b16 %v612, %v612
        %v645 = vpack.c.b16 %v613, %v613
        %v646 = vpack.c.b16 %v614, %v614
        %v647 = vpack.c.b16 %v615, %v615
        %v648 = vpack.c.b16 %v616, %v616
        %v649 = vpack.c.b16 %v617, %v617
        %v650 = vpack.c.b16 %v618, %v618
        %v651 = vpack.c.b16 %v619, %v619
        %684 = vst [vmem:[%s164] sm:$0xf] %v620
        %685 = vst [vmem:[%s164 + $0x4] sm:$0xf] %v621
        %686 = vst [vmem:[%s164 + $0x8] sm:$0xf] %v622
        %687 = vst [vmem:[%s164 + $0xc] sm:$0xf] %v623
        %688 = vst [vmem:[%s164 + $0x10] sm:$0xf] %v624
        %689 = vst [vmem:[%s164 + $0x14] sm:$0xf] %v625
        %690 = vst [vmem:[%s164 + $0x18] sm:$0xf] %v626
        %691 = vst [vmem:[%s164 + $0x1c] sm:$0xf] %v627
        %692 = vst [vmem:[%s164 + $0x20] sm:$0xf] %v628
        %693 = vst [vmem:[%s164 + $0x24] sm:$0xf] %v629
        %694 = vst [vmem:[%s164 + $0x28] sm:$0xf] %v630
        %695 = vst [vmem:[%s164 + $0x2c] sm:$0xf] %v631
        %696 = vst [vmem:[%s164 + $0x30] sm:$0xf] %v632
        %697 = vst [vmem:[%s164 + $0x34] sm:$0xf] %v633
        %698 = vst [vmem:[%s164 + $0x38] sm:$0xf] %v634
        %699 = vst [vmem:[%s164 + $0x3c] sm:$0xf] %v635
        %700 = vst [vmem:[%s164 + $0x40] sm:$0xf] %v636
        %701 = vst [vmem:[%s164 + $0x44] sm:$0xf] %v637
        %702 = vst [vmem:[%s164 + $0x48] sm:$0xf] %v638
        %703 = vst [vmem:[%s164 + $0x4c] sm:$0xf] %v639
        %704 = vst [vmem:[%s164 + $0x50] sm:$0xf] %v640
        %705 = vst [vmem:[%s164 + $0x54] sm:$0xf] %v641
        %706 = vst [vmem:[%s164 + $0x58] sm:$0xf] %v642
        %707 = vst [vmem:[%s164 + $0x5c] sm:$0xf] %v643
        %708 = vst [vmem:[%s164 + $0x60] sm:$0xf] %v644
        %709 = vst [vmem:[%s164 + $0x64] sm:$0xf] %v645
        %710 = vst [vmem:[%s164 + $0x68] sm:$0xf] %v646
        %711 = vst [vmem:[%s164 + $0x6c] sm:$0xf] %v647
        %712 = vst [vmem:[%s164 + $0x70] sm:$0xf] %v648
        %713 = vst [vmem:[%s164 + $0x74] sm:$0xf] %v649
        %714 = vst [vmem:[%s164 + $0x78] sm:$0xf] %v650
        %715 = vst [vmem:[%s164 + $0x7c] sm:$0xf] %v651
        %s716 = sand.u32 %s93, 1
        %s717 = scalar_lea.sflag [#allocation3], %s716
        %s718 = sand.u32 %s93, 1
        %s719 = smul.addr %s718, 128
        %s720 = scalar_lea.vmem [#allocation2], %s719
        // Predicated region
        $region33: #{tpu_custom_call.1} parent=31 // pred_check
          %p721 = pneg %p103
        $region34: #{tpu_custom_call.1} parent=31 // pred_check_branch
          %723 = sbr.rel (%p721) target = $region36
        $region35: #{tpu_custom_call.1} parent=31 // pred_region
          %s724 = smul.u32 32, %s17
          %s726 = ssub.s32 2048, 2048
          %727 = vsyncadd %s717, %s726
          %s728 = smul.addr %s724, 64
          %s729 = scalar_lea.hbm %s3, %s728
          %s730 = sshll.u32 %s720, 4
          %s731 = int_to_ptr.vmem [resolvable:$true] %s730
          %736 = dma.vmem_to_hbm [thread:$0]  %s731, 2048, %s729, %s717, 64, 64, 4
        $region36: #{tpu_custom_call.1} parent=31 // pred_fallthru
          _
      $region32: #{tpu_custom_call.1} parent=5 // pred_fallthru
        _
      %p737 = scmp.le.s32.totalorder 2, %s12
      // Predicated region
      $region37: #{tpu_custom_call.1} parent=5 // pred_check
        %p738 = pneg %p737
      $region38: #{tpu_custom_call.1} parent=5 // pred_check_branch
        %740 = sbr.rel (%p738) target = $region40
      $region39: #{tpu_custom_call.1} parent=5 // pred_region
        %s741 = ssub.s32 %s12, 2
        // Predicated region
        $region41: #{tpu_custom_call.1} parent=39 // pred_check
          %p742 = pneg %p109
        $region42: #{tpu_custom_call.1} parent=39 // pred_check_branch
          %744 = sbr.rel (%p742) target = $region44
        $region43: #{tpu_custom_call.1} parent=39 // pred_region
          %s745 = sand.u32 %s94, 1
          %s746 = scalar_lea.sflag [#allocation3], %s745
          %s747 = sand.u32 %s94, 1
          %s748 = smul.addr %s747, 128
          %s749 = scalar_lea.vmem [#allocation2], %s748
          %750 = dma.done %s746, 2048
        $region44: #{tpu_custom_call.1} parent=39 // pred_fallthru
          _
      $region40: #{tpu_custom_call.1} parent=5 // pred_fallthru
        _
    $region6: #{tpu_custom_call.1} parent=1 // loop_footer
      %s16 = sadd.s32 1, %s12
    $region7: #{tpu_custom_call.1} parent=1 // loop_footer_branch
      %11 = sbr.rel target = $region3
    $region8: #{tpu_custom_call.1} parent=1 // loop_exit
      _
    %751 = vsyncpa [#allocation3], 1
    %s752 = scalar_lea.sflag [#allocation3], 1
    %753 = vsyncpa %s752, 1

</llo_original>
